<compile_context>
chip_gen: v6e
topology: v6e:2x2x1
jax: 0.10.0
libtpu: 0.0.40
codegen_flags: <defaults>
</compile_context>

<pallas_src>
import functools

import jax
import jax.numpy as jnp
from jax import lax
from jax.experimental import pallas as pl
from jax.experimental.pallas import tpu as pltpu


def _round_up(x, m):
    return ((x + m - 1) // m) * m


def _cdiv(a, b):
    return (a + b - 1) // b


# --------------------------------------------------------------------------- #
# Kernel: video cosine-similarity attention (unnormalized softmax), tiled over
# the (padded) library dimension and split 2-way for megacore.  Outputs
# p = exp(clip(cos_sim, 0, 1)) of shape (B, Npad) and per-split partial softmax
# denominators of shape (n_splits, B, 1) as resident accumulators.
# --------------------------------------------------------------------------- #
def _attention_kernel(n_valid, tile_n, needs_mask,
                      q_ref, k_ref, invn_ref, p_ref, l_ref):
    c = pl.program_id(0)            # megacore split (parallel)
    n = pl.program_id(1)            # library tile within the split (arbitrary)

    @pl.when(n == 0)
    def _init():
        l_ref[...] = jnp.zeros_like(l_ref)

    # bf16 MXU matmul, f32 accumulation; contract D of BOTH operands so the
    # (tile_n, D) library tile is consumed exactly as streamed (no transpose).
    s = lax.dot_general(q_ref[...], k_ref[...],
                        dimension_numbers=(((1,), (1,)), ((), ())),
                        preferred_element_type=jnp.float32)       # (B, tN)

    # library L2-normalization hoisted to a (1, tN) post-scale (query is
    # pre-normalized in the wrapper), so cos_sim == scaled dot product.
    s = s * invn_ref[...]
    p = jnp.exp(jnp.clip(s, 0.0, 1.0))                            # in [1, e]

    if needs_mask:
        # zero out padded library columns so they contribute nothing to p / l
        tile = c * pl.num_programs(1) + n
        col = tile * tile_n + lax.broadcasted_iota(jnp.int32, p.shape, 1)
        p = jnp.where(col < n_valid, p, 0.0)

    p_ref[...] = p
    l_ref[...] += jnp.sum(p, axis=-1, keepdims=True)[None]        # (1, B, 1)


class MultiRetrievalAugmentedEmbeddingV4:
    """JAX/Pallas port of the PyTorch module (inference path)."""

    def __init__(self, top_k=25, train_skip_self=False, block_n=2048):
        self.top_k = top_k
        self.skip_self = train_skip_self
        self.block_n = block_n
        # Parameters exactly as in the PyTorch __init__ (zeros).
        self.temp_vid = jnp.zeros((1,), jnp.float32)
        self.temp_aud = jnp.zeros((1,), jnp.float32)   # gated by *0 -> unused
        self.temp_ocr = jnp.zeros((1,), jnp.float32)   # gated by *0 -> unused

    # ------------------------------------------------------------------ #
    # Pallas attention: p = exp(clip(cos_sim(v, n_feats))) and softmax denom.
    # ------------------------------------------------------------------ #
    def _attention(self, v, n_feats):
        B, Dv = v.shape
        N = n_feats.shape[0]

        # ---- tiling: lane-aligned tile, 2-way split, pad N up --------------
        tile_n = _round_up(min(self.block_n, _round_up(N, 128)), 128)
        num_tiles = _cdiv(N, tile_n)
        n_splits = 2 if num_tiles >= 2 else 1       # both TCs on v7x
        num_tiles = _round_up(num_tiles, n_splits)
        inner = num_tiles // n_splits
        n_pad = num_tiles * tile_n
        needs_mask = n_pad != N

        # ---- hoisted prep (tiny vs the N*D library stream) -----------------
        vf = v.astype(jnp.float32)
        q_n = vf * lax.rsqrt(jnp.maximum(jnp.sum(vf * vf, -1, keepdims=True),
                                         1e-24))
        q_n = q_n.astype(jnp.bfloat16)                            # (B, D)

        kf = n_feats.astype(jnp.float32)
        inv_norm = lax.rsqrt(jnp.maximum(jnp.sum(kf * kf, -1), 1e-24))[None, :]
        k_bf = n_feats.astype(jnp.bfloat16)                       # bf16 stream
        if n_pad != N:
            k_bf = jnp.pad(k_bf, ((0, n_pad - N), (0, 0)))
            inv_norm = jnp.pad(inv_norm, ((0, 0), (0, n_pad - N)))

        kernel = functools.partial(_attention_kernel, N, tile_n, needs_mask)
        p, l_parts = pl.pallas_call(
            kernel,
            out_shape=(jax.ShapeDtypeStruct((B, n_pad), jnp.float32),
                       jax.ShapeDtypeStruct((n_splits, B, 1), jnp.float32)),
            grid_spec=pltpu.PrefetchScalarGridSpec(
                num_scalar_prefetch=0,
                grid=(n_splits, inner),
                in_specs=[
                    pl.BlockSpec((B, Dv), lambda c, n: (0, 0)),
                    pl.BlockSpec((tile_n, Dv), lambda c, n: (c * inner + n, 0)),
                    pl.BlockSpec((1, tile_n), lambda c, n: (0, c * inner + n)),
                ],
                out_specs=[
                    pl.BlockSpec((B, tile_n), lambda c, n: (0, c * inner + n)),
                    pl.BlockSpec((1, B, 1), lambda c, n: (c, 0, 0)),
                ],
            ),
            compiler_params=pltpu.CompilerParams(
                dimension_semantics=("parallel", "arbitrary")),
        )(q_n, k_bf, inv_norm)

        l = jnp.sum(l_parts, axis=0)                              # (B, 1)
        if n_pad != N:
            p = p[:, :N]
        return p, l

    def __call__(self, v, n_feats, aud, n_auds, ocr, n_ocrs, o, n_answ):
        del aud, n_auds, ocr, n_ocrs    # statically zero-gated branches
        N = n_feats.shape[0]

        p, l = self._attention(v, n_feats)                        # (B,N), (B,1)

        # ---- TopKGroup: shared union mask of every row's top-k indices ------
        k = min(self.top_k, N)
        _, topk_idx = lax.top_k(p, k)                             # (B, k)
        flat = topk_idx.reshape(-1)                               # (B*k,)
        # dedup: mask sets each index to 1 once, however often it appears
        eq = flat[:, None] == flat[None, :]
        keep = (jnp.argmax(eq, axis=1) ==
                jnp.arange(flat.shape[0])).astype(jnp.float32)    # (B*k,)
        if self.skip_self:
            self_top = jnp.argmax(p, axis=-1)                     # (B,)
            keep = jnp.where(
                jnp.any(flat[:, None] == self_top[None, :], axis=1), 0.0, keep)

        # ---- masked attention @ answer library on the selected rows only ----
        # (replaces a second full-N masked library scan; >=99% of rows are 0)
        p_sel = jnp.take(p, flat, axis=1) * keep[None, :]         # (B, B*k)
        a_sel = jnp.take(n_answ.astype(jnp.float32), flat, axis=0)  # (B*k, Do)

        vid_gate = jax.nn.sigmoid(self.temp_vid[0]) * 2.0
        opt = jnp.dot(p_sel, a_sel) * (vid_gate / l)              # (B, Do)

        # per-option scores; o is (B, 3, Do)
        scores = jnp.einsum('bd,bod->bo', opt, o.astype(jnp.float32))

        # gt_answer_int is None -> (scores, None, None)
        return scores, None, None


if __name__ == "__main__":
    key = jax.random.PRNGKey(0)
    B, N = 2, 300                     # N not a multiple of 128 -> pad/mask path
    v_dim, a_dim, ocr_dim, o_dim = 64, 64, 64, 32

    ks = jax.random.split(key, 8)
    v       = jax.random.normal(ks[0], (B, v_dim), jnp.float32)
    n_feats = jax.random.normal(ks[1], (N, v_dim), jnp.float32)
    aud     = jax.random.normal(ks[2], (B, a_dim), jnp.float32)
    n_auds  = jax.random.normal(ks[3], (N, a_dim), jnp.float32)
    ocr     = jnp.abs(jax.random.normal(ks[4], (B, ocr_dim), jnp.float32))
    n_ocrs  = jax.random.normal(ks[5], (N, ocr_dim), jnp.float32)
    o       = jax.random.normal(ks[6], (B, 3, o_dim), jnp.float32)
    n_answ  = jax.random.normal(ks[7], (N, o_dim), jnp.float32)

    # small tile so the demo exercises the multi-tile, 2-way-split, padded grid
    model = MultiRetrievalAugmentedEmbeddingV4(top_k=25, train_skip_self=False,
                                               block_n=128)

    # --- correctness of the Pallas kernel vs a pure-f32 JAX reference --------
    p, l = jax.jit(model._attention)(v, n_feats)
    jax.block_until_ready(p)
    qn = v / jnp.maximum(jnp.linalg.norm(v, axis=-1, keepdims=True), 1e-12)
    kn = n_feats / jnp.maximum(jnp.linalg.norm(n_feats, axis=-1, keepdims=True),
                               1e-12)
    p_ref = jnp.exp(jnp.clip(qn @ kn.T, 0.0, 1.0))
    l_ref = jnp.sum(p_ref, axis=-1, keepdims=True)
    assert p.shape == (B, N) and l.shape == (B, 1)
    assert bool(jnp.allclose(p, p_ref, rtol=5e-2, atol=5e-2))
    assert bool(jnp.allclose(l, l_ref, rtol=5e-2, atol=5e-1))

    # --- full forward (jittable end-to-end, no host syncs) -------------------
    fwd = jax.jit(lambda *args: model(*args))
    scores, loss, metric = fwd(v, n_feats, aud, n_auds, ocr, n_ocrs, o, n_answ)
    jax.block_until_ready(scores)

    assert scores.shape == (B, 3) and scores.dtype == jnp.float32
    assert bool(jnp.all(jnp.isfinite(scores)))
    assert loss is None and metric is None
    print("KERNEL_OK")
</pallas_src>

<mosaic_0001>
module attributes {stable_mosaic.version = 11 : i64} {
  func.func @_attention_kernel(%arg0: i32, %arg1: i32, %arg2: memref<2x64xbf16, #tpu.memory_space<vmem>>, %arg3: memref<128x64xbf16, #tpu.memory_space<vmem>>, %arg4: memref<1x128xf32, #tpu.memory_space<vmem>>, %arg5: memref<2x128xf32, #tpu.memory_space<vmem>>, %arg6: memref<1x2x1xf32, #tpu.memory_space<vmem>>) attributes {dimension_semantics = [#tpu.dimension_semantics<parallel>, #tpu.dimension_semantics<arbitrary>], iteration_bounds = array<i64: 2, 2>, scalar_prefetch = 0 : i64, scratch_operands = 0 : i64, tpu.core_type = #tpu.core_type<tc>, window_params = [{pipeline_mode = #tpu.pipeline_mode<synchronous>, transform_indices = @transform_0, window_bounds = array<i64: 2, 64>}, {transform_indices = @transform_1, window_bounds = array<i64: 128, 64>}, {transform_indices = @transform_2, window_bounds = array<i64: 1, 128>}, {transform_indices = @transform_3, window_bounds = array<i64: 2, 128>}, {transform_indices = @transform_4, window_bounds = array<i64: 1, 2, 1>}]} {
    %c0_i32 = arith.constant 0 : i32
    %0 = arith.cmpi eq, %arg1, %c0_i32 : i32
    %1 = arith.extui %0 : i1 to i32
    %c0_i32_0 = arith.constant 0 : i32
    %2 = arith.cmpi ne, %1, %c0_i32_0 : i32
    scf.if %2 {
      %cst_18 = arith.constant 0.000000e+00 : f32
      %31 = vector.broadcast %cst_18 : f32 to vector<1x2x1xf32>
      %c0_19 = arith.constant 0 : index
      %c0_20 = arith.constant 0 : index
      %c0_21 = arith.constant 0 : index
      %32 = vector.load %arg6[%c0_19, %c0_20, %c0_21] : memref<1x2x1xf32, #tpu.memory_space<vmem>>, vector<1x2x1xf32>
      tpu.vector_store %arg6[%c0_19, %c0_20, %c0_21], %31 {strides = array<i32>} : memref<1x2x1xf32, #tpu.memory_space<vmem>>, vector<1x2x1xf32>,
    } else {
    }
    %c0 = arith.constant 0 : index
    %c0_1 = arith.constant 0 : index
    %3 = vector.load %arg2[%c0, %c0_1] : memref<2x64xbf16, #tpu.memory_space<vmem>>, vector<2x64xbf16>
    %c0_2 = arith.constant 0 : index
    %c0_3 = arith.constant 0 : index
    %4 = vector.load %arg3[%c0_2, %c0_3] : memref<128x64xbf16, #tpu.memory_space<vmem>>, vector<128x64xbf16>
    %cst = arith.constant dense<0.000000e+00> : vector<2x128xf32>
    %5 = tpu.matmul %3, %4, %cst {dimension_numbers = #tpu.dot_dimension_numbers<[1], [1], [0], [0], [0, 0, 1, 0], [], []>} : vector<2x64xbf16>, vector<128x64xbf16>, vector<2x128xf32> -> vector<2x128xf32>
    %c0_4 = arith.constant 0 : index
    %c0_5 = arith.constant 0 : index
    %6 = vector.load %arg4[%c0_4, %c0_5] : memref<1x128xf32, #tpu.memory_space<vmem>>, vector<1x128xf32>
    %7 = vector.broadcast %6 : vector<1x128xf32> to vector<2x128xf32>
    %8 = arith.mulf %5, %7 : vector<2x128xf32>
    %cst_6 = arith.constant 0.000000e+00 : f32
    %cst_7 = arith.constant 1.000000e+00 : f32
    %9 = vector.broadcast %cst_6 : f32 to vector<2x128xf32>
    %10 = arith.maximumf %9, %8 : vector<2x128xf32>
    %11 = vector.broadcast %cst_7 : f32 to vector<2x128xf32>
    %12 = arith.minimumf %11, %10 : vector<2x128xf32>
    %13 = math.exp %12 : vector<2x128xf32>
    %c2_i32 = arith.constant 2 : i32
    %14 = arith.muli %arg0, %c2_i32 : i32
    %15 = arith.addi %14, %arg1 : i32
    %c128_i32 = arith.constant 128 : i32
    %16 = arith.muli %15, %c128_i32 : i32
    %17 = tpu.iota {dimensions = array<i32: 1>} : vector<2x128xi32>
    %18 = vector.broadcast %16 : i32 to vector<2x128xi32>
    %19 = arith.addi %18, %17 : vector<2x128xi32>
    %c300_i32 = arith.constant 300 : i32
    %20 = vector.broadcast %c300_i32 : i32 to vector<2x128xi32>
    %21 = arith.cmpi slt, %19, %20 : vector<2x128xi32>
    %cst_8 = arith.constant 0.000000e+00 : f32
    %22 = vector.broadcast %cst_8 : f32 to vector<2x128xf32>
    %23 = arith.select %21, %13, %22 : vector<2x128xi1>, vector<2x128xf32>
    %c0_9 = arith.constant 0 : index
    %c0_10 = arith.constant 0 : index
    %24 = vector.load %arg5[%c0_9, %c0_10] : memref<2x128xf32, #tpu.memory_space<vmem>>, vector<2x128xf32>
    tpu.vector_store %arg5[%c0_9, %c0_10], %23 {strides = array<i32>} : memref<2x128xf32, #tpu.memory_space<vmem>>, vector<2x128xf32>,
    %c0_11 = arith.constant 0 : index
    %c0_12 = arith.constant 0 : index
    %c0_13 = arith.constant 0 : index
    %25 = vector.load %arg6[%c0_11, %c0_12, %c0_13] : memref<1x2x1xf32, #tpu.memory_space<vmem>>, vector<1x2x1xf32>
    %cst_14 = arith.constant dense<0.000000e+00> : vector<2xf32>
    %26 = vector.multi_reduction <add>, %23, %cst_14 [1] : vector<2x128xf32> to vector<2xf32>
    %27 = vector.shape_cast %26 : vector<2xf32> to vector<2x1xf32>
    %28 = vector.shape_cast %27 : vector<2x1xf32> to vector<1x2x1xf32>
    %29 = arith.addf %25, %28 : vector<1x2x1xf32>
    %c0_15 = arith.constant 0 : index
    %c0_16 = arith.constant 0 : index
    %c0_17 = arith.constant 0 : index
    %30 = vector.load %arg6[%c0_15, %c0_16, %c0_17] : memref<1x2x1xf32, #tpu.memory_space<vmem>>, vector<1x2x1xf32>
    tpu.vector_store %arg6[%c0_15, %c0_16, %c0_17], %29 {strides = array<i32>} : memref<1x2x1xf32, #tpu.memory_space<vmem>>, vector<1x2x1xf32>,
    return
  }
  func.func @transform_0(%arg0: i32, %arg1: i32) -> (i32, i32) {
    %c0_i32 = arith.constant 0 : i32
    %c0_i32_0 = arith.constant 0 : i32
    %c0_i32_1 = arith.constant 0 : i32
    return %c0_i32, %c0_i32_0 : i32, i32
  }
  func.func @transform_1(%arg0: i32, %arg1: i32) -> (i32, i32) {
    %c2_i32 = arith.constant 2 : i32
    %0 = arith.muli %arg0, %c2_i32 : i32
    %1 = arith.addi %0, %arg1 : i32
    %c0_i32 = arith.constant 0 : i32
    %c0_i32_0 = arith.constant 0 : i32
    return %1, %c0_i32 : i32, i32
  }
  func.func @transform_2(%arg0: i32, %arg1: i32) -> (i32, i32) {
    %c2_i32 = arith.constant 2 : i32
    %0 = arith.muli %arg0, %c2_i32 : i32
    %1 = arith.addi %0, %arg1 : i32
    %c0_i32 = arith.constant 0 : i32
    %c0_i32_0 = arith.constant 0 : i32
    return %c0_i32, %1 : i32, i32
  }
  func.func @transform_3(%arg0: i32, %arg1: i32) -> (i32, i32) {
    %c2_i32 = arith.constant 2 : i32
    %0 = arith.muli %arg0, %c2_i32 : i32
    %1 = arith.addi %0, %arg1 : i32
    %c0_i32 = arith.constant 0 : i32
    %c0_i32_0 = arith.constant 0 : i32
    return %c0_i32, %1 : i32, i32
  }
  func.func @transform_4(%arg0: i32, %arg1: i32) -> (i32, i32, i32) {
    %c0_i32 = arith.constant 0 : i32
    %c0_i32_0 = arith.constant 0 : i32
    %c0_i32_1 = arith.constant 0 : i32
    return %arg0, %c0_i32, %c0_i32_0 : i32, i32, i32
  }
}

</mosaic_0001>

<llo_original>
// kernel: _attention.1
$region0: #{_attention.1}
  #allocation0 [shape = 'u32[]', space=smem, size = 0x4, offset = 0x4, fixed_abs, tag = 'smem constant byte address 0x4 - core index']
  #allocation1 [shape = 'u32[144,128]{1,0:T(1,128)}', space=vmem, size = 0x12000, scoped, tag = 'internal scratch']
  %s0 = inlined_call_operand.vmem [shape: bf16[2,64], index: 0, kind: input, shape index: {}]
  %s1 = inlined_call_operand.vmem [shape: bf16[512,64], index: 1, kind: input, shape index: {}]
  %s2 = inlined_call_operand.vmem [shape: f32[1,512], index: 2, kind: input, shape index: {}]
  %s3 = inlined_call_operand.vmem [shape: f32[2,512], index: 3, kind: output, shape index: {0}]
  %s4 = inlined_call_operand.vmem [shape: f32[2,2,1], index: 4, kind: output, shape index: {1}]
  %5 = xla_tuple %s3, %s4
  %s6 = sld [smem:[#allocation0]]
  $region57: #{_attention.1} parent=0
    _
  %s8 = ssub.s32 1, %s6
  %s9 = scalar_select 0, %s8, %s6
  loop: start=0, step=1, limit=6
  $region2: #{_attention.1} parent=0 // loop_pre_header
    _
  $region3: #{_attention.1} parent=0 // loop_header
    %s11 = sphi 0, %s15
    %p12 = scmp.ge.s32.totalorder %s11, 6
    %s18 = sphi 0, %s30
    %s19 = sphi 0, %s26
    %s20 = sphi 0, %s18
    %s21 = sphi 0, %s19
    %s22 = sphi 0, %s20
    %s23 = sphi 0, %s21
    %s31 = sphi 0, %s31
    %s33 = sphi 0, %s31
    %s34 = sphi 0, %s33
    %s48 = sphi 0, %s34
    %s58 = sphi 0, %s60
    %s61 = sphi 0, %s58
    %s62 = sphi 0, %s61
    %s78 = sphi 0, %s62
    %s88 = sphi 0, %s90
    %s91 = sphi 0, %s88
    %s92 = sphi 0, %s91
    %s108 = sphi 0, %s92
    %s118 = sphi 0, %s120
    %s121 = sphi 0, %s118
    %s122 = sphi 0, %s121
    %s138 = sphi 0, %s122
    %s144 = sphi 0, %s146
    %s147 = sphi 0, %s144
    %s148 = sphi 0, %s147
    %s164 = sphi 0, %s148
  $region4: #{_attention.1} parent=0 // loop_header_branch
    %14 = sbr.rel (%p12) target = $region8
  $region5: #{_attention.1} parent=0 // loop_body
    %s16 = ssub.s32 %s11, 1
    %s17 = ssub.s32 %s11, 2
    %s24 = sadd.s32 1, %s19
    %p25 = scmp.ge.s32.totalorder %s24, 2
    %s26 = scalar_select %p25, 0, %s24
    %s27 = sadd.s32 1, %s18
    %s28 = scalar_select %p25, %s27, %s18
    %p29 = scmp.ge.s32.totalorder %s28, 2
    %s30 = scalar_select %p29, 0, %s28
    %s32 = sadd.s32 %s31, 1
    %p35 = scmp.eq.s32.totalorder %s11, 3
    %p36 = scmp.ne.s32.totalorder %s31, %s33
    %p37 = scmp.eq.s32.totalorder %s11, 0
    %p38 = por %p36, %p37
    %p39 = scmp.ne.s32.totalorder %s31, %s33
    %p40 = scmp.eq.s32.totalorder %s16, 3
    %p41 = por %p39, %p40
    %p42 = scmp.ne.s32.totalorder %s33, %s34
    %p43 = scmp.eq.s32.totalorder %s16, 0
    %p44 = por %p42, %p43
    %p45 = scmp.ne.s32.totalorder %s33, %s34
    %p46 = scmp.eq.s32.totalorder %s17, 3
    %p47 = por %p45, %p46
    %p49 = scmp.ne.s32.totalorder %s34, %s48
    %p50 = scmp.eq.s32.totalorder %s17, 0
    %p51 = por %p49, %p50
    %s52 = smul.u32 %s18, 2
    %s53 = sadd.s32 %s52, %s19
    %s54 = smul.u32 %s30, 2
    %s55 = sadd.s32 %s54, %s26
    %s56 = ssub.s32 %s53, %s55
    %p57 = scmp.eq.s32.totalorder %s56, 0
    %s59 = sadd.s32 %s58, 1
    %s60 = scalar_select %p57, %s58, %s59
    %p63 = pneg %p57
    %p64 = scmp.eq.s32.totalorder %s11, 3
    %p65 = por %p63, %p64
    %p66 = scmp.ne.s32.totalorder %s58, %s61
    %p67 = scmp.eq.s32.totalorder %s11, 0
    %p68 = por %p66, %p67
    %p69 = scmp.ne.s32.totalorder %s58, %s61
    %p70 = scmp.eq.s32.totalorder %s16, 3
    %p71 = por %p69, %p70
    %p72 = scmp.ne.s32.totalorder %s61, %s62
    %p73 = scmp.eq.s32.totalorder %s16, 0
    %p74 = por %p72, %p73
    %p75 = scmp.ne.s32.totalorder %s61, %s62
    %p76 = scmp.eq.s32.totalorder %s17, 3
    %p77 = por %p75, %p76
    %p79 = scmp.ne.s32.totalorder %s62, %s78
    %p80 = scmp.eq.s32.totalorder %s17, 0
    %p81 = por %p79, %p80
    %s82 = smul.u32 %s18, 2
    %s83 = sadd.s32 %s82, %s19
    %s84 = smul.u32 %s30, 2
    %s85 = sadd.s32 %s84, %s26
    %s86 = ssub.s32 %s83, %s85
    %p87 = scmp.eq.s32.totalorder %s86, 0
    %s89 = sadd.s32 %s88, 1
    %s90 = scalar_select %p87, %s88, %s89
    %p93 = pneg %p87
    %p94 = scmp.eq.s32.totalorder %s11, 3
    %p95 = por %p93, %p94
    %p96 = scmp.ne.s32.totalorder %s88, %s91
    %p97 = scmp.eq.s32.totalorder %s11, 0
    %p98 = por %p96, %p97
    %p99 = scmp.ne.s32.totalorder %s88, %s91
    %p100 = scmp.eq.s32.totalorder %s16, 3
    %p101 = por %p99, %p100
    %p102 = scmp.ne.s32.totalorder %s91, %s92
    %p103 = scmp.eq.s32.totalorder %s16, 0
    %p104 = por %p102, %p103
    %p105 = scmp.ne.s32.totalorder %s91, %s92
    %p106 = scmp.eq.s32.totalorder %s17, 3
    %p107 = por %p105, %p106
    %p109 = scmp.ne.s32.totalorder %s92, %s108
    %p110 = scmp.eq.s32.totalorder %s17, 0
    %p111 = por %p109, %p110
    %s112 = smul.u32 %s18, 2
    %s113 = sadd.s32 %s112, %s19
    %s114 = smul.u32 %s30, 2
    %s115 = sadd.s32 %s114, %s26
    %s116 = ssub.s32 %s113, %s115
    %p117 = scmp.eq.s32.totalorder %s116, 0
    %s119 = sadd.s32 %s118, 1
    %s120 = scalar_select %p117, %s118, %s119
    %p123 = pneg %p117
    %p124 = scmp.eq.s32.totalorder %s11, 3
    %p125 = por %p123, %p124
    %p126 = scmp.ne.s32.totalorder %s118, %s121
    %p127 = scmp.eq.s32.totalorder %s11, 0
    %p128 = por %p126, %p127
    %p129 = scmp.ne.s32.totalorder %s118, %s121
    %p130 = scmp.eq.s32.totalorder %s16, 3
    %p131 = por %p129, %p130
    %p132 = scmp.ne.s32.totalorder %s121, %s122
    %p133 = scmp.eq.s32.totalorder %s16, 0
    %p134 = por %p132, %p133
    %p135 = scmp.ne.s32.totalorder %s121, %s122
    %p136 = scmp.eq.s32.totalorder %s17, 3
    %p137 = por %p135, %p136
    %p139 = scmp.ne.s32.totalorder %s122, %s138
    %p140 = scmp.eq.s32.totalorder %s17, 0
    %p141 = por %p139, %p140
    %s142 = ssub.s32 %s18, %s30
    %p143 = scmp.eq.s32.totalorder %s142, 0
    %s145 = sadd.s32 %s144, 1
    %s146 = scalar_select %p143, %s144, %s145
    %p149 = pneg %p143
    %p150 = scmp.eq.s32.totalorder %s11, 3
    %p151 = por %p149, %p150
    %p152 = scmp.ne.s32.totalorder %s144, %s147
    %p153 = scmp.eq.s32.totalorder %s11, 0
    %p154 = por %p152, %p153
    %p155 = scmp.ne.s32.totalorder %s144, %s147
    %p156 = scmp.eq.s32.totalorder %s16, 3
    %p157 = por %p155, %p156
    %p158 = scmp.ne.s32.totalorder %s147, %s148
    %p159 = scmp.eq.s32.totalorder %s16, 0
    %p160 = por %p158, %p159
    %p161 = scmp.ne.s32.totalorder %s147, %s148
    %p162 = scmp.eq.s32.totalorder %s17, 3
    %p163 = por %p161, %p162
    %p165 = scmp.ne.s32.totalorder %s148, %s164
    %p166 = scmp.eq.s32.totalorder %s17, 0
    %p167 = por %p165, %p166
    %p168 = scmp.le.s32.totalorder 1, %s11
    %p169 = scmp.lt.s32.totalorder %s11, 5
    %p170 = pnand %p168, %p169
    %p171 = pneg %p170
    // Predicated region
    $region9: #{_attention.1} parent=5 // pred_check
      _
    $region10: #{_attention.1} parent=5 // pred_check_branch
      %173 = sbr.rel (%p170) target = $region12
    $region11: #{_attention.1} parent=5 // pred_region
      %s174 = ssub.s32 %s11, 1
      // Predicated region
      $region13: #{_attention.1} parent=11 // pred_check
        %p175 = pneg %p44
      $region14: #{_attention.1} parent=11 // pred_check_branch
        %177 = sbr.rel (%p175) target = $region16
      $region15: #{_attention.1} parent=11 // pred_region
        _
      $region16: #{_attention.1} parent=11 // pred_fallthru
        _
    $region12: #{_attention.1} parent=5 // pred_fallthru
      _
    %p178 = scmp.lt.s32.totalorder %s11, 4
    // Predicated region
    $region17: #{_attention.1} parent=5 // pred_check
      %p179 = pneg %p178
    $region18: #{_attention.1} parent=5 // pred_check_branch
      %181 = sbr.rel (%p179) target = $region20
    $region19: #{_attention.1} parent=5 // pred_region
      // Predicated region
      $region21: #{_attention.1} parent=19 // pred_check
        %p182 = pneg %p68
      $region22: #{_attention.1} parent=19 // pred_check_branch
        %184 = sbr.rel (%p182) target = $region24
      $region23: #{_attention.1} parent=19 // pred_region
        %s185 = smul.u32 %s18, 2
        %s186 = sadd.s32 %s185, %s19
        %s187 = smul.u32 16, %s186
        %p188 = scmp.lt.s32.totalorder %s187, 63
        %s189 = scalar_select %p188, %s187, 63
        %s190 = smul.addr %s189, 4
        %s191 = scalar_lea.vmem %s1, %s190
        %s192 = smul.u32 %s18, 2
        %s193 = sadd.s32 %s192, %s19
        %s194 = smul.u32 16, %s193
      $region24: #{_attention.1} parent=19 // pred_fallthru
        _
      // Predicated region
      $region25: #{_attention.1} parent=19 // pred_check
        %p195 = pneg %p98
      $region26: #{_attention.1} parent=19 // pred_check_branch
        %197 = sbr.rel (%p195) target = $region28
      $region27: #{_attention.1} parent=19 // pred_region
        %s198 = smul.u32 %s18, 2
        %s199 = sadd.s32 %s198, %s19
        %p200 = scmp.lt.s32.totalorder %s199, 3
        %s201 = scalar_select %p200, %s199, 3
        %s202 = scalar_lea.vmem %s2, %s201
        %s203 = smul.u32 %s18, 2
        %s204 = sadd.s32 %s203, %s19
      $region28: #{_attention.1} parent=19 // pred_fallthru
        _
    $region20: #{_attention.1} parent=5 // pred_fallthru
      _
    %p205 = scmp.le.s32.totalorder 1, %s11
    %p206 = scmp.lt.s32.totalorder %s11, 5
    %p207 = pnand %p205, %p206
    %p208 = pneg %p207
    // Predicated region
    $region29: #{_attention.1} parent=5 // pred_check
      _
    $region30: #{_attention.1} parent=5 // pred_check_branch
      %210 = sbr.rel (%p207) target = $region32
    $region31: #{_attention.1} parent=5 // pred_region
      %s211 = ssub.s32 %s11, 1
      %p212 = pneg %p44
      %p213 = pneg %p41
      %s214 = smul.u32 %s20, 2
      %s215 = sadd.s32 %s214, %s21
      %s216 = smul.u32 16, %s215
      %p217 = scmp.lt.s32.totalorder %s216, 63
      %s218 = scalar_select %p217, %s216, 63
      %s219 = smul.addr %s218, 4
      %s220 = scalar_lea.vmem %s1, %s219
      %p221 = pneg %p74
      %p222 = pneg %p71
      %s223 = smul.u32 %s20, 2
      %s224 = sadd.s32 %s223, %s21
      %p225 = scmp.lt.s32.totalorder %s224, 3
      %s226 = scalar_select %p225, %s224, 3
      %s227 = scalar_lea.vmem %s2, %s226
      %p228 = pneg %p104
      %p229 = pneg %p101
      %p230 = pneg %p134
      %p231 = pneg %p131
      %s232 = smul.u32 %s20, 2
      %s233 = sadd.s32 %s232, %s21
      %p234 = scmp.lt.s32.totalorder %s233, 3
      %s235 = scalar_select %p234, %s233, 3
      %s236 = smul.addr %s235, 2
      %s237 = scalar_lea.vmem %s3, %s236
      %p238 = pneg %p160
      %p239 = pneg %p157
      %p240 = scmp.lt.s32.totalorder %s20, 1
      %s241 = scalar_select %p240, %s20, 1
      %s242 = smul.addr %s241, 2
      %s243 = scalar_lea.vmem %s4, %s242
      %s244 = smul.u32 %s20, 2
      %s245 = sadd.s32 %s244, %s21
      %s246 = smul.u32 16, %s245
      %p247 = scmp.lt.s32.totalorder %s246, 63
      %s248 = scalar_select %p247, %s246, 63
      %s249 = smul.addr %s248, 4
      %s250 = scalar_lea.vmem %s1, %s249
      %s251 = smul.u32 %s20, 2
      %s252 = sadd.s32 %s251, %s21
      %s253 = smul.u32 16, %s252
      %s254 = smul.u32 %s20, 2
      %s255 = sadd.s32 %s254, %s21
      %p256 = scmp.lt.s32.totalorder %s255, 3
      %s257 = scalar_select %p256, %s255, 3
      %s258 = scalar_lea.vmem %s2, %s257
      %s259 = smul.u32 %s20, 2
      %s260 = sadd.s32 %s259, %s21
      %s261 = smul.u32 %s20, 2
      %s262 = sadd.s32 %s261, %s21
      %p263 = scmp.lt.s32.totalorder %s262, 3
      %s264 = scalar_select %p263, %s262, 3
      %s265 = smul.addr %s264, 2
      %s266 = scalar_lea.vmem %s3, %s265
      %s267 = smul.u32 %s20, 2
      %s268 = sadd.s32 %s267, %s21
      %p269 = scmp.lt.s32.totalorder %s20, 1
      %s270 = scalar_select %p269, %s20, 1
      %s271 = smul.addr %s270, 2
      %s272 = scalar_lea.vmem %s4, %s271
      %p274 = scmp.eq.s32.totalorder %s21, 0
      // Predicated region
      $region33: #{_attention.1} parent=31 // pred_check
        %p275 = pneg %p274
      $region34: #{_attention.1} parent=31 // pred_check_branch
        %277 = sbr.rel (%p275) target = $region36
      $region35: #{_attention.1} parent=31 // pred_region
        %vm278 = vcmask 1024
        %279 = vst.msk [vmem:[%s272] sm:$0x3] %vm278, 0.0
      $region36: #{_attention.1} parent=31 // pred_fallthru
        _
      %v280 = vld [vmem:[%s0] sm:$0x1]
      %v281 = vld [vmem:[%s250] sm:$0xf]
      %v282 = vld [vmem:[%s250 + $0x4] sm:$0xf]
      %v283 = vld [vmem:[%s250 + $0x8] sm:$0xf]
      %v284 = vld [vmem:[%s250 + $0xc] sm:$0xf]
      %v285 = vld [vmem:[%s250 + $0x10] sm:$0xf]
      %v286 = vld [vmem:[%s250 + $0x14] sm:$0xf]
      %v287 = vld [vmem:[%s250 + $0x18] sm:$0xf]
      %v288 = vld [vmem:[%s250 + $0x1c] sm:$0xf]
      %v289 = vld [vmem:[%s250 + $0x20] sm:$0xf]
      %v290 = vld [vmem:[%s250 + $0x24] sm:$0xf]
      %v291 = vld [vmem:[%s250 + $0x28] sm:$0xf]
      %v292 = vld [vmem:[%s250 + $0x2c] sm:$0xf]
      %v293 = vld [vmem:[%s250 + $0x30] sm:$0xf]
      %v294 = vld [vmem:[%s250 + $0x34] sm:$0xf]
      %v295 = vld [vmem:[%s250 + $0x38] sm:$0xf]
      %v296 = vld [vmem:[%s250 + $0x3c] sm:$0xf]
      %v313 = vunpack.c.l.b16 %v281
      %v314 = vunpack.c.l.b16 %v282
      %v315 = vunpack.c.l.b16 %v283
      %v316 = vunpack.c.l.b16 %v284
      %v317 = vunpack.c.l.b16 %v285
      %v318 = vunpack.c.l.b16 %v286
      %v319 = vunpack.c.l.b16 %v287
      %v320 = vunpack.c.l.b16 %v288
      %v321 = vunpack.c.l.b16 %v289
      %v322 = vunpack.c.l.b16 %v290
      %v323 = vunpack.c.l.b16 %v291
      %v324 = vunpack.c.l.b16 %v292
      %v325 = vunpack.c.l.b16 %v293
      %v326 = vunpack.c.l.b16 %v294
      %v327 = vunpack.c.l.b16 %v295
      %v328 = vunpack.c.l.b16 %v296
      %v329 = vpack.c.b16 %v314, %v313
      %v330 = vpack.c.b16 %v316, %v315
      %v331 = vpack.c.b16 %v318, %v317
      %v332 = vpack.c.b16 %v320, %v319
      %v333 = vpack.c.b16 %v322, %v321
      %v334 = vpack.c.b16 %v324, %v323
      %v335 = vpack.c.b16 %v326, %v325
      %v336 = vpack.c.b16 %v328, %v327
      %vm337 = vcmask 523264
      %v339 = vsel %vm337, %v280, 0
      %v342 = vsel %vm337, %v329, 0
      %v345 = vsel %vm337, %v330, 0
      %v348 = vsel %vm337, %v331, 0
      %v351 = vsel %vm337, %v332, 0
      %v354 = vsel %vm337, %v333, 0
      %v357 = vsel %vm337, %v334, 0
      %v360 = vsel %vm337, %v335, 0
      %v363 = vsel %vm337, %v336, 0
      %365 = vmatprep.subr.bf16.mxu0 0
      %366 = vmatpush1.bf16.xpose.msra.mxu0 %v363
      %367 = vmatprep.subr.bf16.mxu0 0
      %368 = vmatpush1.bf16.xpose.msra.mxu0 %v360
      %369 = vmatprep.subr.bf16.mxu0 0
      %370 = vmatpush1.bf16.xpose.msra.mxu0 %v357
      %371 = vmatprep.subr.bf16.mxu0 0
      %372 = vmatpush1.bf16.xpose.msra.mxu0 %v354
      %373 = vmatprep.subr.bf16.mxu0 0
      %374 = vmatpush1.bf16.xpose.msra.mxu0 %v351
      %375 = vmatprep.subr.bf16.mxu0 0
      %376 = vmatpush1.bf16.xpose.msra.mxu0 %v348
      %377 = vmatprep.subr.bf16.mxu0 0
      %378 = vmatpush1.bf16.xpose.msra.mxu0 %v345
      %379 = vmatprep.subr.bf16.mxu0 0
      %380 = vmatpush1.bf16.xpose.msra.mxu0 %v342
      %381 = vmatprep.subr.bf16.mxu0 0
      %382 = vmatpush2.bf16.xpose.msra.mxu0 0
      %383 = vmatprep.subr.bf16.mxu0 0
      %384 = vmatpush2.bf16.xpose.msra.mxu0 0
      %385 = vmatprep.subr.bf16.mxu0 0
      %386 = vmatpush2.bf16.xpose.msra.mxu0 0
      %387 = vmatprep.subr.bf16.mxu0 0
      %388 = vmatpush2.bf16.xpose.msra.mxu0 0
      %389 = vmatprep.subr.bf16.mxu0 0
      %390 = vmatpush2.bf16.xpose.msra.mxu0 0
      %391 = vmatprep.subr.bf16.mxu0 0
      %392 = vmatpush2.bf16.xpose.msra.mxu0 0
      %393 = vmatprep.subr.bf16.mxu0 0
      %394 = vmatpush2.bf16.xpose.msra.mxu0 0
      %395 = vmatprep.subr.bf16.mxu0 0
      %396 = vmatpush2.bf16.xpose.msra.mxu0 0
      %397 = vmatprep.mubr.bf16.mxu0 0
      %398 = vmatmul.mubr.bf16.gmra.mxu0 %v339
      %v399 = vpop.f32.mrf.mxu0
      %v400 = vadd.f32 0.0, %v399
      %v401 = vpop.f32.mrf.mxu0
      %v402 = vpop.f32.mrf.mxu0
      %v403 = vpop.f32.mrf.mxu0
      %404 = vdwg.mxu0
      %v405 = vld [vmem:[%s258] sm:$0x1]
      %v407 = vlaneseq
      %v408 = vshrl.u32 %v407, 7
      %v409 = vsub.s32 0, %v408
      %v410 = vrot.slane %v405, %v409
      %v412 = vmul.f32 %v400, %v410
      %v413 = vmax.f32 %v412, 0.0
      %v414 = vmin.f32 %v413, 1.0
      %v415 = vmul.f32 %v414, 1.442695
      %v416 = vpow.pop %v415
      %s417 = smul.u32 %s20, 2
      %s418 = sadd.s32 %s417, %s21
      %s419 = smul.u32 %s418, 128
      %v420 = vlaneseq
      %v421 = vand.u32 %v420, 127
      %v422 = vstv %s419
      %v423 = vadd.s32 %v422, %v421
      %vm424 = vcmp.lt.s32.totalorder %v423, 300
      %v425 = vsel %vm424, %v416, 0.0
      %426 = vst [vmem:[%s266] sm:$0x3] %v425
      %v427 = vld [vmem:[%s272] sm:$0x3]
      %vm428 = vcmask 1041408
      %v429 = vsel %vm428, %v425, 0.0
      %430 = vadd.xlane.f32.xlu0 %v429
      %v431 = vpop.xlane.xlu0 %430
      %v432 = vadd.f32 %v427, %v431
      %vm433 = vcmask 1024
      %434 = vst.msk [vmem:[%s272] sm:$0x3] %vm433, %v432
      %s435 = smul.u32 %s20, 2
      %s436 = sadd.s32 %s435, %s21
      %p437 = scmp.lt.s32.totalorder %s436, 3
      %s438 = scalar_select %p437, %s436, 3
      %s439 = smul.addr %s438, 2
      %s440 = scalar_lea.vmem %s3, %s439
      %p441 = scmp.lt.s32.totalorder %s20, 1
      %s442 = scalar_select %p441, %s20, 1
      %s443 = smul.addr %s442, 2
      %s444 = scalar_lea.vmem %s4, %s443
      // Predicated region
      $region37: #{_attention.1} parent=31 // pred_check
        %p445 = pneg %p131
      $region38: #{_attention.1} parent=31 // pred_check_branch
        %447 = sbr.rel (%p445) target = $region40
      $region39: #{_attention.1} parent=31 // pred_region
        %s448 = smul.u32 %s20, 2
        %s449 = sadd.s32 %s448, %s21
      $region40: #{_attention.1} parent=31 // pred_fallthru
        _
      // Predicated region
      $region41: #{_attention.1} parent=31 // pred_check
        %p450 = pneg %p157
      $region42: #{_attention.1} parent=31 // pred_check_branch
        %452 = sbr.rel (%p450) target = $region44
      $region43: #{_attention.1} parent=31 // pred_region
        _
      $region44: #{_attention.1} parent=31 // pred_fallthru
        _
    $region32: #{_attention.1} parent=5 // pred_fallthru
      _
    %p453 = scmp.le.s32.totalorder 2, %s11
    // Predicated region
    $region45: #{_attention.1} parent=5 // pred_check
      %p454 = pneg %p453
    $region46: #{_attention.1} parent=5 // pred_check_branch
      %456 = sbr.rel (%p454) target = $region48
    $region47: #{_attention.1} parent=5 // pred_region
      %s457 = ssub.s32 %s11, 2
      // Predicated region
      $region49: #{_attention.1} parent=47 // pred_check
        %p458 = pneg %p137
      $region50: #{_attention.1} parent=47 // pred_check_branch
        %460 = sbr.rel (%p458) target = $region52
      $region51: #{_attention.1} parent=47 // pred_region
        %s461 = smul.u32 %s22, 2
        %s462 = sadd.s32 %s461, %s23
        %p463 = scmp.lt.s32.totalorder %s462, 3
        %s464 = scalar_select %p463, %s462, 3
        %s465 = smul.addr %s464, 2
        %s466 = scalar_lea.vmem %s3, %s465
      $region52: #{_attention.1} parent=47 // pred_fallthru
        _
      // Predicated region
      $region53: #{_attention.1} parent=47 // pred_check
        %p467 = pneg %p163
      $region54: #{_attention.1} parent=47 // pred_check_branch
        %469 = sbr.rel (%p467) target = $region56
      $region55: #{_attention.1} parent=47 // pred_region
        %p470 = scmp.lt.s32.totalorder %s22, 1
        %s471 = scalar_select %p470, %s22, 1
        %s472 = smul.addr %s471, 2
        %s473 = scalar_lea.vmem %s4, %s472
      $region56: #{_attention.1} parent=47 // pred_fallthru
        _
    $region48: #{_attention.1} parent=5 // pred_fallthru
      _
  $region6: #{_attention.1} parent=0 // loop_footer
    %s15 = sadd.s32 1, %s11
  $region7: #{_attention.1} parent=0 // loop_footer_branch
    %10 = sbr.rel target = $region3
  $region8: #{_attention.1} parent=0 // loop_exit
    _

</llo_original>
